<compile_context>
chip_gen: v7x
topology: tpu7x:2x2x1
jax: 0.10.0
libtpu: 0.0.40
codegen_flags: <defaults>
</compile_context>

<pallas_src>
import jax
import jax.numpy as jnp
from jax.experimental import pallas as pl
from jax.experimental.pallas import tpu as pltpu


def _cdiv(a, b):
    return -(-a // b)


def _round_up(x, m):
    return ((x + m - 1) // m) * m


def _vmem_params():
    """(tile working-set budget, scoped vmem limit, lane-tile cap) per chip gen."""
    cap = 128 * 1024 * 1024
    try:
        cap = int(getattr(pltpu.get_tpu_info(), "vmem_capacity_bytes", cap))
    except Exception:
        pass
    if cap <= 96 * 1024 * 1024:          # v7x-class: 64 MiB VMEM per TensorCore
        return 16 * 1024 * 1024, 40 * 1024 * 1024, 1024
    return 24 * 1024 * 1024, 48 * 1024 * 1024, 2048   # v5e / v6e: 128 MiB


def _pick_tiles(n, d, b, itemsize, budget, tb_cap):
    """Pick (td, tb) sublane/lane tile sizes.

    Double-buffered working set per grid step is roughly
        2 * (N inputs + N-deep combined block + aggs block) * td * tb * itemsize
      = 2 * (2N + 1) * td * tb * itemsize.
    """
    td = d if d <= 512 else 512          # full-D (always legal) or 512-sublane chunks

    def max_tb(td_):
        per_lane = 2 * (2 * n + 1) * td_ * itemsize
        return (budget // per_lane // 128) * 128

    tb = max_tb(td)
    while tb < 128 and td > 8:           # pathological N*D: shrink D tile, keep lanes dense
        td = max(8, (td // 2) // 8 * 8)
        tb = max_tb(td)
    tb = max(128, min(tb, tb_cap))
    tb = min(tb, _round_up(b, 128))      # never stream (much) past B
    # Guarantee >= 2 grid steps for non-tiny batches so both v7x TCs run.
    if _cdiv(d, td) * _cdiv(b, tb) < 2 and b > 256:
        tb = max(128, _round_up(_cdiv(b, 2), 128))
    return td, tb


def _make_fused_kernel(n):
    def kernel(*refs):
        in_refs = refs[:n]               # each (td, tb)
        comb_ref = refs[n]               # (N, td, tb)
        aggs_ref = refs[n + 1]           # (td, tb)
        acc = in_refs[0][...]
        comb_ref[0] = acc
        for j in range(1, n):            # static unroll over the (small) stack axis
            x = in_refs[j][...]
            comb_ref[j] = x
            acc = jnp.minimum(acc, x)
        aggs_ref[...] = acc
    return kernel


def _fused_stack_min_pallas(embeds_list):
    n = len(embeds_list)
    d, b = embeds_list[0].shape
    dtype = embeds_list[0].dtype
    itemsize = jnp.dtype(dtype).itemsize

    budget, vmem_limit, tb_cap = _vmem_params()
    td, tb = _pick_tiles(n, d, b, itemsize, budget, tb_cap)
    grid = (_cdiv(d, td), _cdiv(b, tb))

    in_specs = [pl.BlockSpec((td, tb), lambda di, bi: (di, bi)) for _ in range(n)]
    out_specs = (
        pl.BlockSpec((n, td, tb), lambda di, bi: (0, di, bi)),   # combined
        pl.BlockSpec((td, tb), lambda di, bi: (di, bi)),         # aggs
    )
    out_shape = (
        jax.ShapeDtypeStruct((n, d, b), dtype),
        jax.ShapeDtypeStruct((d, b), dtype),
    )

    combined, aggs = pl.pallas_call(
        _make_fused_kernel(n),
        out_shape=out_shape,
        grid_spec=pl.GridSpec(grid=grid, in_specs=in_specs, out_specs=out_specs),
        compiler_params=pltpu.CompilerParams(
            dimension_semantics=("parallel", "parallel"),
            vmem_limit_bytes=vmem_limit,
        ),
        cost_estimate=pl.CostEstimate(
            flops=(n - 1) * d * b,                          # element-wise compares
            transcendentals=0,
            bytes_accessed=(2 * n + 1) * d * b * itemsize,  # N reads + (N + 1) writes
        ),
    )(*embeds_list)
    return aggs, combined


def simple_set_intersection(embeds_list):
    """Returns (aggs, combined): element-wise min over the stack axis + the stack."""
    dtype = jnp.result_type(*embeds_list)
    embeds_list = [jnp.asarray(e, dtype) for e in embeds_list]
    d, b = embeds_list[0].shape

    # Tiny shapes: fixed pallas_call / grid-step overhead dominates; plain XLA
    # fusion is faster and exact (element-wise min).
    if b < 128 or d * b < 16384:
        combined = jnp.stack(embeds_list)
        return jnp.min(combined, axis=0), combined

    return _fused_stack_min_pallas(embeds_list)


class SimpleSetIntersection:
    """JAX/Pallas port of tfkge.netquery.decoders.SimpleSetIntersection."""

    def __init__(self, agg_func="min"):
        # TODO(synk): only the default torch.min aggregation has a Pallas path;
        # arbitrary agg_func callables are not translated.
        if agg_func != "min":
            raise NotImplementedError("only element-wise min is supported")
        self.agg_func = agg_func

    def forward(self, mode, embeds_list):
        # `mode` is unused by the computation (kept for signature parity).
        if len(embeds_list) < 2:
            raise Exception("The intersection needs more than one embeding")
        return simple_set_intersection(embeds_list)

    __call__ = forward


if __name__ == "__main__":
    dec = SimpleSetIntersection()

    # 1) Tiny shapes consistent with the module (XLA bypass path).
    N, D, B = 3, 32, 8
    keys = jax.random.split(jax.random.PRNGKey(0), N)
    small = [jax.random.normal(k, (D, B), dtype=jnp.float32) for k in keys]
    aggs, combined = dec.forward("t1", small)
    jax.block_until_ready(aggs)
    ref_c = jnp.stack(small)
    assert aggs.shape == (D, B) and combined.shape == (N, D, B)
    assert jnp.array_equal(combined, ref_c)
    assert jnp.array_equal(aggs, jnp.min(ref_c, axis=0))

    # 2) Fused Pallas path: lane-saturating B that is NOT a multiple of the
    #    lane tile (exercises multi-tile grid + overhanging final block).
    N2, D2, B2 = 3, 64, 416
    keys2 = jax.random.split(jax.random.PRNGKey(0), N2)
    med = [jax.random.normal(k, (D2, B2), dtype=jnp.float32) for k in keys2]
    aggs2, combined2 = dec.forward("t1", med)
    jax.block_until_ready(aggs2)
    ref_c2 = jnp.stack(med)
    assert aggs2.shape == (D2, B2) and combined2.shape == (N2, D2, B2)
    assert jnp.array_equal(combined2, ref_c2)
    assert jnp.array_equal(aggs2, jnp.min(ref_c2, axis=0))

    # 3) bf16 streaming path (native dtype: half the DMA bytes, multi-tile).
    N3, D3, B3 = 2, 128, 640
    k1, k2 = jax.random.split(jax.random.PRNGKey(1))
    big = [jax.random.normal(k1, (D3, B3), dtype=jnp.bfloat16),
           jax.random.normal(k2, (D3, B3), dtype=jnp.bfloat16)]
    aggs3, combined3 = dec.forward("t1", big)
    jax.block_until_ready(aggs3)
    ref_c3 = jnp.stack(big)
    assert aggs3.shape == (D3, B3) and aggs3.dtype == jnp.bfloat16
    assert jnp.array_equal(combined3, ref_c3)
    assert jnp.array_equal(aggs3, jnp.min(ref_c3, axis=0))

    print("KERNEL_OK")
</pallas_src>

<mosaic_0001>
module attributes {stable_mosaic.version = 11 : i64} {
  func.func @kernel(%arg0: i32, %arg1: i32, %arg2: memref<64x256xf32, #tpu.memory_space<vmem>>, %arg3: memref<64x256xf32, #tpu.memory_space<vmem>>, %arg4: memref<64x256xf32, #tpu.memory_space<vmem>>, %arg5: memref<3x64x256xf32, #tpu.memory_space<vmem>>, %arg6: memref<64x256xf32, #tpu.memory_space<vmem>>) attributes {dimension_semantics = [#tpu.dimension_semantics<parallel>, #tpu.dimension_semantics<parallel>], iteration_bounds = array<i64: 1, 2>, scalar_prefetch = 0 : i64, scratch_operands = 0 : i64, tpu.core_type = #tpu.core_type<tc>, window_params = [{transform_indices = @transform_0, window_bounds = array<i64: 64, 256>}, {transform_indices = @transform_1, window_bounds = array<i64: 64, 256>}, {transform_indices = @transform_2, window_bounds = array<i64: 64, 256>}, {transform_indices = @transform_3, window_bounds = array<i64: 3, 64, 256>}, {transform_indices = @transform_4, window_bounds = array<i64: 64, 256>}]} {
    %c0 = arith.constant 0 : index
    %c0_0 = arith.constant 0 : index
    %0 = vector.load %arg2[%c0, %c0_0] : memref<64x256xf32, #tpu.memory_space<vmem>>, vector<64x256xf32>
    %c0_1 = arith.constant 0 : index
    %c0_2 = arith.constant 0 : index
    %c0_3 = arith.constant 0 : index
    %1 = vector.load %arg5[%c0_1, %c0_2, %c0_3] : memref<3x64x256xf32, #tpu.memory_space<vmem>>, vector<1x64x256xf32>
    %2 = vector.shape_cast %1 : vector<1x64x256xf32> to vector<64x256xf32>
    %3 = vector.shape_cast %0 : vector<64x256xf32> to vector<1x64x256xf32>
    tpu.vector_store %arg5[%c0_1, %c0_2, %c0_3], %3 {strides = array<i32>} : memref<3x64x256xf32, #tpu.memory_space<vmem>>, vector<1x64x256xf32>,
    %c0_4 = arith.constant 0 : index
    %c0_5 = arith.constant 0 : index
    %4 = vector.load %arg3[%c0_4, %c0_5] : memref<64x256xf32, #tpu.memory_space<vmem>>, vector<64x256xf32>
    %c1 = arith.constant 1 : index
    %c0_6 = arith.constant 0 : index
    %c0_7 = arith.constant 0 : index
    %5 = vector.load %arg5[%c1, %c0_6, %c0_7] : memref<3x64x256xf32, #tpu.memory_space<vmem>>, vector<1x64x256xf32>
    %6 = vector.shape_cast %5 : vector<1x64x256xf32> to vector<64x256xf32>
    %7 = vector.shape_cast %4 : vector<64x256xf32> to vector<1x64x256xf32>
    tpu.vector_store %arg5[%c1, %c0_6, %c0_7], %7 {strides = array<i32>} : memref<3x64x256xf32, #tpu.memory_space<vmem>>, vector<1x64x256xf32>,
    %8 = arith.minimumf %0, %4 : vector<64x256xf32>
    %c0_8 = arith.constant 0 : index
    %c0_9 = arith.constant 0 : index
    %9 = vector.load %arg4[%c0_8, %c0_9] : memref<64x256xf32, #tpu.memory_space<vmem>>, vector<64x256xf32>
    %c2 = arith.constant 2 : index
    %c0_10 = arith.constant 0 : index
    %c0_11 = arith.constant 0 : index
    %10 = vector.load %arg5[%c2, %c0_10, %c0_11] : memref<3x64x256xf32, #tpu.memory_space<vmem>>, vector<1x64x256xf32>
    %11 = vector.shape_cast %10 : vector<1x64x256xf32> to vector<64x256xf32>
    %12 = vector.shape_cast %9 : vector<64x256xf32> to vector<1x64x256xf32>
    tpu.vector_store %arg5[%c2, %c0_10, %c0_11], %12 {strides = array<i32>} : memref<3x64x256xf32, #tpu.memory_space<vmem>>, vector<1x64x256xf32>,
    %13 = arith.minimumf %8, %9 : vector<64x256xf32>
    %c0_12 = arith.constant 0 : index
    %c0_13 = arith.constant 0 : index
    %14 = vector.load %arg6[%c0_12, %c0_13] : memref<64x256xf32, #tpu.memory_space<vmem>>, vector<64x256xf32>
    tpu.vector_store %arg6[%c0_12, %c0_13], %13 {strides = array<i32>} : memref<64x256xf32, #tpu.memory_space<vmem>>, vector<64x256xf32>,
    return
  }
  func.func @transform_0(%arg0: i32, %arg1: i32) -> (i32, i32) {
    %c0_i32 = arith.constant 0 : i32
    return %arg0, %arg1 : i32, i32
  }
  func.func @transform_1(%arg0: i32, %arg1: i32) -> (i32, i32) {
    %c0_i32 = arith.constant 0 : i32
    return %arg0, %arg1 : i32, i32
  }
  func.func @transform_2(%arg0: i32, %arg1: i32) -> (i32, i32) {
    %c0_i32 = arith.constant 0 : i32
    return %arg0, %arg1 : i32, i32
  }
  func.func @transform_3(%arg0: i32, %arg1: i32) -> (i32, i32, i32) {
    %c0_i32 = arith.constant 0 : i32
    %c0_i32_0 = arith.constant 0 : i32
    return %c0_i32, %arg0, %arg1 : i32, i32, i32
  }
  func.func @transform_4(%arg0: i32, %arg1: i32) -> (i32, i32) {
    %c0_i32 = arith.constant 0 : i32
    return %arg0, %arg1 : i32, i32
  }
}

</mosaic_0001>

<llo_original>
// kernel: tpu_custom_call.1
$region0: #{tpu_custom_call.1}
  #allocation0 [shape = 'u32[]', space=smem, size = 0x4, offset = 0x4, fixed_abs, tag = 'smem constant byte address 0x4 - core index']
  #allocation1 [shape = 'u32[144,128]{1,0:T(1,128)}', space=vmem, size = 0x12000, scoped, tag = 'internal scratch']
  %s0 = inlined_call_operand.hbm [shape: f32[64,416], index: 0, kind: input, shape index: {}]
  %s1 = inlined_call_operand.hbm [shape: f32[64,416], index: 1, kind: input, shape index: {}]
  %s2 = inlined_call_operand.hbm [shape: f32[64,416], index: 2, kind: input, shape index: {}]
  %s3 = inlined_call_operand.hbm [shape: f32[3,64,416], index: 3, kind: output, shape index: {0}]
  %s4 = inlined_call_operand.hbm [shape: f32[64,416], index: 4, kind: output, shape index: {1}]
  %5 = xla_tuple %s3, %s4
  %s6 = sld [smem:[#allocation0]]
  $region65: #{tpu_custom_call.1} parent=0
    _
  %s8 = ssub.s32 1, %s6
  %s9 = scalar_select 0, %s8, %s6
  $region1: #{tpu_custom_call.1} parent=0
    #allocation2 [shape = 'u8[131072]{0}', space=vmem, size = 0x20000, scoped, tag = 'input window, operand 0']
    #allocation3 [shape = 's32[2]{0}', space=sflag, size = 0x8, scoped, tag = 'scoped memory for tpu_custom_call.1']
    #allocation4 [shape = 's32[2]{0}', space=sflag, size = 0x8, scoped, tag = 'scoped memory for tpu_custom_call.1']
    #allocation5 [shape = 'u8[131072]{0}', space=vmem, size = 0x20000, scoped, tag = 'input window, operand 1']
    #allocation6 [shape = 's32[2]{0}', space=sflag, size = 0x8, scoped, tag = 'scoped memory for tpu_custom_call.1']
    #allocation7 [shape = 'u8[131072]{0}', space=vmem, size = 0x20000, scoped, tag = 'input window, operand 2']
    #allocation8 [shape = 'u8[393216]{0}', space=vmem, size = 0x60000, scoped, tag = 'output window, operand 0']
    #allocation9 [shape = 'u8[131072]{0}', space=vmem, size = 0x20000, scoped, tag = 'output window, operand 1']
    #allocation10 [shape = 's32[2]{0}', space=sflag, size = 0x8, scoped, tag = 'scoped memory for tpu_custom_call.1']
    %10 = vsyncpa [#allocation3], 0
    %s11 = scalar_lea.sflag [#allocation3], 1
    %12 = vsyncpa %s11, 0
    %13 = vsyncpa [#allocation6], 0
    %s14 = scalar_lea.sflag [#allocation6], 1
    %15 = vsyncpa %s14, 0
    %16 = vsyncpa [#allocation4], 0
    %s17 = scalar_lea.sflag [#allocation4], 1
    %18 = vsyncpa %s17, 0
    %19 = vsyncpa [#allocation10], 0
    %s20 = scalar_lea.sflag [#allocation10], 1
    %21 = vsyncpa %s20, 0
    loop: start=0, step=1, limit=4
    $region2: #{tpu_custom_call.1} parent=1 // loop_pre_header
      _
    $region3: #{tpu_custom_call.1} parent=1 // loop_header
      %s23 = sphi 0, %s27
      %p24 = scmp.ge.s32.totalorder %s23, 4
      %s30 = sphi 0, %s42
      %s31 = sphi 0, %s38
      %s32 = sphi 0, %s30
      %s33 = sphi 0, %s31
      %s34 = sphi 0, %s32
      %s35 = sphi 0, %s33
      %s47 = sphi 0, %s49
      %s50 = sphi 0, %s47
      %s51 = sphi 0, %s50
      %s67 = sphi 0, %s51
      %s75 = sphi 0, %s77
      %s78 = sphi 0, %s75
      %s79 = sphi 0, %s78
      %s95 = sphi 0, %s79
      %s103 = sphi 0, %s105
      %s106 = sphi 0, %s103
      %s107 = sphi 0, %s106
      %s123 = sphi 0, %s107
      %s131 = sphi 0, %s133
      %s134 = sphi 0, %s131
      %s135 = sphi 0, %s134
      %s151 = sphi 0, %s135
      %s159 = sphi 0, %s161
      %s162 = sphi 0, %s159
      %s163 = sphi 0, %s162
      %s179 = sphi 0, %s163
    $region4: #{tpu_custom_call.1} parent=1 // loop_header_branch
      %26 = sbr.rel (%p24) target = $region8
    $region5: #{tpu_custom_call.1} parent=1 // loop_body
      %s28 = ssub.s32 %s23, 1
      %s29 = ssub.s32 %s23, 2
      %s36 = sadd.s32 1, %s31
      %p37 = scmp.ge.s32.totalorder %s36, 2
      %s38 = scalar_select %p37, 0, %s36
      %s39 = sadd.s32 1, %s30
      %s40 = scalar_select %p37, %s39, %s30
      %p41 = scmp.ge.s32.totalorder %s40, 1
      %s42 = scalar_select %p41, 0, %s40
      %s43 = ssub.s32 %s30, %s42
      %s44 = ssub.s32 %s31, %s38
      %s45 = sor.u32 %s43, %s44
      %p46 = scmp.eq.s32.totalorder %s45, 0
      %s48 = sadd.s32 %s47, 1
      %s49 = scalar_select %p46, %s47, %s48
      %p52 = pneg %p46
      %p53 = scmp.eq.s32.totalorder %s23, 1
      %p54 = por %p52, %p53
      %p55 = scmp.ne.s32.totalorder %s47, %s50
      %p56 = scmp.eq.s32.totalorder %s23, 0
      %p57 = por %p55, %p56
      %p58 = scmp.ne.s32.totalorder %s47, %s50
      %p59 = scmp.eq.s32.totalorder %s28, 1
      %p60 = por %p58, %p59
      %p61 = scmp.ne.s32.totalorder %s50, %s51
      %p62 = scmp.eq.s32.totalorder %s28, 0
      %p63 = por %p61, %p62
      %p64 = scmp.ne.s32.totalorder %s50, %s51
      %p65 = scmp.eq.s32.totalorder %s29, 1
      %p66 = por %p64, %p65
      %p68 = scmp.ne.s32.totalorder %s51, %s67
      %p69 = scmp.eq.s32.totalorder %s29, 0
      %p70 = por %p68, %p69
      %s71 = ssub.s32 %s30, %s42
      %s72 = ssub.s32 %s31, %s38
      %s73 = sor.u32 %s71, %s72
      %p74 = scmp.eq.s32.totalorder %s73, 0
      %s76 = sadd.s32 %s75, 1
      %s77 = scalar_select %p74, %s75, %s76
      %p80 = pneg %p74
      %p81 = scmp.eq.s32.totalorder %s23, 1
      %p82 = por %p80, %p81
      %p83 = scmp.ne.s32.totalorder %s75, %s78
      %p84 = scmp.eq.s32.totalorder %s23, 0
      %p85 = por %p83, %p84
      %p86 = scmp.ne.s32.totalorder %s75, %s78
      %p87 = scmp.eq.s32.totalorder %s28, 1
      %p88 = por %p86, %p87
      %p89 = scmp.ne.s32.totalorder %s78, %s79
      %p90 = scmp.eq.s32.totalorder %s28, 0
      %p91 = por %p89, %p90
      %p92 = scmp.ne.s32.totalorder %s78, %s79
      %p93 = scmp.eq.s32.totalorder %s29, 1
      %p94 = por %p92, %p93
      %p96 = scmp.ne.s32.totalorder %s79, %s95
      %p97 = scmp.eq.s32.totalorder %s29, 0
      %p98 = por %p96, %p97
      %s99 = ssub.s32 %s30, %s42
      %s100 = ssub.s32 %s31, %s38
      %s101 = sor.u32 %s99, %s100
      %p102 = scmp.eq.s32.totalorder %s101, 0
      %s104 = sadd.s32 %s103, 1
      %s105 = scalar_select %p102, %s103, %s104
      %p108 = pneg %p102
      %p109 = scmp.eq.s32.totalorder %s23, 1
      %p110 = por %p108, %p109
      %p111 = scmp.ne.s32.totalorder %s103, %s106
      %p112 = scmp.eq.s32.totalorder %s23, 0
      %p113 = por %p111, %p112
      %p114 = scmp.ne.s32.totalorder %s103, %s106
      %p115 = scmp.eq.s32.totalorder %s28, 1
      %p116 = por %p114, %p115
      %p117 = scmp.ne.s32.totalorder %s106, %s107
      %p118 = scmp.eq.s32.totalorder %s28, 0
      %p119 = por %p117, %p118
      %p120 = scmp.ne.s32.totalorder %s106, %s107
      %p121 = scmp.eq.s32.totalorder %s29, 1
      %p122 = por %p120, %p121
      %p124 = scmp.ne.s32.totalorder %s107, %s123
      %p125 = scmp.eq.s32.totalorder %s29, 0
      %p126 = por %p124, %p125
      %s127 = ssub.s32 %s30, %s42
      %s128 = ssub.s32 %s31, %s38
      %s129 = sor.u32 %s127, %s128
      %p130 = scmp.eq.s32.totalorder %s129, 0
      %s132 = sadd.s32 %s131, 1
      %s133 = scalar_select %p130, %s131, %s132
      %p136 = pneg %p130
      %p137 = scmp.eq.s32.totalorder %s23, 1
      %p138 = por %p136, %p137
      %p139 = scmp.ne.s32.totalorder %s131, %s134
      %p140 = scmp.eq.s32.totalorder %s23, 0
      %p141 = por %p139, %p140
      %p142 = scmp.ne.s32.totalorder %s131, %s134
      %p143 = scmp.eq.s32.totalorder %s28, 1
      %p144 = por %p142, %p143
      %p145 = scmp.ne.s32.totalorder %s134, %s135
      %p146 = scmp.eq.s32.totalorder %s28, 0
      %p147 = por %p145, %p146
      %p148 = scmp.ne.s32.totalorder %s134, %s135
      %p149 = scmp.eq.s32.totalorder %s29, 1
      %p150 = por %p148, %p149
      %p152 = scmp.ne.s32.totalorder %s135, %s151
      %p153 = scmp.eq.s32.totalorder %s29, 0
      %p154 = por %p152, %p153
      %s155 = ssub.s32 %s30, %s42
      %s156 = ssub.s32 %s31, %s38
      %s157 = sor.u32 %s155, %s156
      %p158 = scmp.eq.s32.totalorder %s157, 0
      %s160 = sadd.s32 %s159, 1
      %s161 = scalar_select %p158, %s159, %s160
      %p164 = pneg %p158
      %p165 = scmp.eq.s32.totalorder %s23, 1
      %p166 = por %p164, %p165
      %p167 = scmp.ne.s32.totalorder %s159, %s162
      %p168 = scmp.eq.s32.totalorder %s23, 0
      %p169 = por %p167, %p168
      %p170 = scmp.ne.s32.totalorder %s159, %s162
      %p171 = scmp.eq.s32.totalorder %s28, 1
      %p172 = por %p170, %p171
      %p173 = scmp.ne.s32.totalorder %s162, %s163
      %p174 = scmp.eq.s32.totalorder %s28, 0
      %p175 = por %p173, %p174
      %p176 = scmp.ne.s32.totalorder %s162, %s163
      %p177 = scmp.eq.s32.totalorder %s29, 1
      %p178 = por %p176, %p177
      %p180 = scmp.ne.s32.totalorder %s163, %s179
      %p181 = scmp.eq.s32.totalorder %s29, 0
      %p182 = por %p180, %p181
      %p183 = scmp.le.s32.totalorder 1, %s23
      %p184 = scmp.lt.s32.totalorder %s23, 3
      %p185 = pnand %p183, %p184
      %p186 = pneg %p185
      // Predicated region
      $region9: #{tpu_custom_call.1} parent=5 // pred_check
        _
      $region10: #{tpu_custom_call.1} parent=5 // pred_check_branch
        %188 = sbr.rel (%p185) target = $region12
      $region11: #{tpu_custom_call.1} parent=5 // pred_region
        %s189 = ssub.s32 %s23, 1
      $region12: #{tpu_custom_call.1} parent=5 // pred_fallthru
        _
      %p190 = scmp.lt.s32.totalorder %s23, 2
      // Predicated region
      $region13: #{tpu_custom_call.1} parent=5 // pred_check
        %p191 = pneg %p190
      $region14: #{tpu_custom_call.1} parent=5 // pred_check_branch
        %193 = sbr.rel (%p191) target = $region16
      $region15: #{tpu_custom_call.1} parent=5 // pred_region
        // Predicated region
        $region17: #{tpu_custom_call.1} parent=15 // pred_check
          %p194 = pneg %p57
        $region18: #{tpu_custom_call.1} parent=15 // pred_check_branch
          %196 = sbr.rel (%p194) target = $region20
        $region19: #{tpu_custom_call.1} parent=15 // pred_region
          %s197 = sand.u32 %s47, 1
          %s198 = scalar_lea.sflag [#allocation3], %s197
          %s199 = sand.u32 %s47, 1
          %s200 = smul.addr %s199, 128
          %s201 = scalar_lea.vmem [#allocation2], %s200
          %s202 = smul.u32 8, %s30
          %s203 = smul.u32 2, %s31
          %s205 = ssub.s32 2048, 2048
          %206 = vsyncadd %s198, %s205
          %s207 = smul.addr %s202, 4
          %s208 = sadd.s32 %s203, %s207
          %s209 = smul.addr %s208, 128
          %s210 = scalar_lea.hbm %s0, %s209
          %s211 = sshll.u32 %s201, 4
          %s212 = int_to_ptr.vmem [resolvable:$true] %s211
          %217 = dma.hbm_to_vmem [thread:$0]  %s210, 2048, %s212, %s198, 512, 256, 16
        $region20: #{tpu_custom_call.1} parent=15 // pred_fallthru
          _
        // Predicated region
        $region21: #{tpu_custom_call.1} parent=15 // pred_check
          %p218 = pneg %p85
        $region22: #{tpu_custom_call.1} parent=15 // pred_check_branch
          %220 = sbr.rel (%p218) target = $region24
        $region23: #{tpu_custom_call.1} parent=15 // pred_region
          %s221 = sand.u32 %s23, 1
          %s222 = scalar_lea.sflag [#allocation6], %s221
          %s223 = sand.u32 %s75, 1
          %s224 = smul.addr %s223, 128
          %s225 = scalar_lea.vmem [#allocation5], %s224
          %s226 = smul.u32 8, %s30
          %s227 = smul.u32 2, %s31
          %s229 = ssub.s32 2048, 2048
          %230 = vsyncadd %s222, %s229
          %s231 = smul.addr %s226, 4
          %s232 = sadd.s32 %s227, %s231
          %s233 = smul.addr %s232, 128
          %s234 = scalar_lea.hbm %s1, %s233
          %s235 = sshll.u32 %s225, 4
          %s236 = int_to_ptr.vmem [resolvable:$true] %s235
          %241 = dma.hbm_to_vmem [thread:$0]  %s234, 2048, %s236, %s222, 512, 256, 16
        $region24: #{tpu_custom_call.1} parent=15 // pred_fallthru
          _
        // Predicated region
        $region25: #{tpu_custom_call.1} parent=15 // pred_check
          %p242 = pneg %p113
        $region26: #{tpu_custom_call.1} parent=15 // pred_check_branch
          %244 = sbr.rel (%p242) target = $region28
        $region27: #{tpu_custom_call.1} parent=15 // pred_region
          %s245 = sand.u32 %s23, 1
          %s246 = scalar_lea.sflag [#allocation6], %s245
          %s247 = sand.u32 %s103, 1
          %s248 = smul.addr %s247, 128
          %s249 = scalar_lea.vmem [#allocation7], %s248
          %s250 = smul.u32 8, %s30
          %s251 = smul.u32 2, %s31
          %s253 = ssub.s32 2048, 2048
          %254 = vsyncadd %s246, %s253
          %s255 = smul.addr %s250, 4
          %s256 = sadd.s32 %s251, %s255
          %s257 = smul.addr %s256, 128
          %s258 = scalar_lea.hbm %s2, %s257
          %s259 = sshll.u32 %s249, 4
          %s260 = int_to_ptr.vmem [resolvable:$true] %s259
          %265 = dma.hbm_to_vmem [thread:$0]  %s258, 2048, %s260, %s246, 512, 256, 16
        $region28: #{tpu_custom_call.1} parent=15 // pred_fallthru
          _
      $region16: #{tpu_custom_call.1} parent=5 // pred_fallthru
        _
      %p266 = scmp.le.s32.totalorder 1, %s23
      %p267 = scmp.lt.s32.totalorder %s23, 3
      %p268 = pnand %p266, %p267
      %p269 = pneg %p268
      // Predicated region
      $region29: #{tpu_custom_call.1} parent=5 // pred_check
        _
      $region30: #{tpu_custom_call.1} parent=5 // pred_check_branch
        %271 = sbr.rel (%p268) target = $region32
      $region31: #{tpu_custom_call.1} parent=5 // pred_region
        %s272 = ssub.s32 %s23, 1
        %s273 = sand.u32 %s50, 1
        %s274 = scalar_lea.sflag [#allocation3], %s273
        %s275 = sand.u32 %s50, 1
        %s276 = smul.addr %s275, 128
        %s277 = scalar_lea.vmem [#allocation2], %s276
        // Predicated region
        $region33: #{tpu_custom_call.1} parent=31 // pred_check
          %p278 = pneg %p63
        $region34: #{tpu_custom_call.1} parent=31 // pred_check_branch
          %280 = sbr.rel (%p278) target = $region36
        $region35: #{tpu_custom_call.1} parent=31 // pred_region
          %281 = dma.done %s274, 2048
        $region36: #{tpu_custom_call.1} parent=31 // pred_fallthru
          _
        %s282 = sand.u32 %s28, 1
        %s283 = scalar_lea.sflag [#allocation6], %s282
        %s284 = sand.u32 %s78, 1
        %s285 = smul.addr %s284, 128
        %s286 = scalar_lea.vmem [#allocation5], %s285
        // Predicated region
        $region37: #{tpu_custom_call.1} parent=31 // pred_check
          %p287 = pneg %p91
        $region38: #{tpu_custom_call.1} parent=31 // pred_check_branch
          %289 = sbr.rel (%p287) target = $region40
        $region39: #{tpu_custom_call.1} parent=31 // pred_region
          %290 = dma.done %s283, 2048
        $region40: #{tpu_custom_call.1} parent=31 // pred_fallthru
          _
        %s291 = sand.u32 %s28, 1
        %s292 = scalar_lea.sflag [#allocation6], %s291
        %s293 = sand.u32 %s106, 1
        %s294 = smul.addr %s293, 128
        %s295 = scalar_lea.vmem [#allocation7], %s294
        // Predicated region
        $region41: #{tpu_custom_call.1} parent=31 // pred_check
          %p296 = pneg %p119
        $region42: #{tpu_custom_call.1} parent=31 // pred_check_branch
          %298 = sbr.rel (%p296) target = $region44
        $region43: #{tpu_custom_call.1} parent=31 // pred_region
          %299 = dma.done %s292, 2048
        $region44: #{tpu_custom_call.1} parent=31 // pred_fallthru
          _
        %s300 = sand.u32 %s50, 1
        %s301 = scalar_lea.sflag [#allocation3], %s300
        %s302 = sand.u32 %s50, 1
        %s303 = smul.addr %s302, 128
        %s304 = scalar_lea.vmem [#allocation2], %s303
        %p305 = pneg %p63
        %p306 = pneg %p60
        %s307 = sand.u32 %s28, 1
        %s308 = scalar_lea.sflag [#allocation6], %s307
        %s309 = sand.u32 %s78, 1
        %s310 = smul.addr %s309, 128
        %s311 = scalar_lea.vmem [#allocation5], %s310
        %p312 = pneg %p91
        %p313 = pneg %p88
        %s314 = sand.u32 %s28, 1
        %s315 = scalar_lea.sflag [#allocation6], %s314
        %s316 = sand.u32 %s106, 1
        %s317 = smul.addr %s316, 128
        %s318 = scalar_lea.vmem [#allocation7], %s317
        %p319 = pneg %p119
        %p320 = pneg %p116
        %p321 = pneg %p147
        %p322 = pneg %p144
        %s323 = sand.u32 %s134, 1
        %s324 = scalar_lea.sflag [#allocation4], %s323
        %s325 = sand.u32 %s134, 1
        %s326 = smul.addr %s325, 384
        %s327 = scalar_lea.vmem [#allocation8], %s326
        %p328 = pneg %p175
        %p329 = pneg %p172
        %s330 = sand.u32 %s162, 1
        %s331 = scalar_lea.sflag [#allocation10], %s330
        %s332 = sand.u32 %s162, 1
        %s333 = smul.addr %s332, 128
        %s334 = scalar_lea.vmem [#allocation9], %s333
        %s335 = smul.u32 8, %s32
        %s336 = smul.u32 2, %s33
        %s337 = smul.u32 8, %s32
        %s338 = smul.u32 2, %s33
        %s339 = smul.u32 8, %s32
        %s340 = smul.u32 2, %s33
        %s341 = smul.u32 8, %s32
        %s342 = smul.u32 2, %s33
        %s343 = smul.u32 8, %s32
        %s344 = smul.u32 2, %s33
        %v345 = vld [vmem:[%s277] sm:$0xff]
        %v346 = vld [vmem:[%s277 + $0x8] sm:$0xff]
        %v347 = vld [vmem:[%s277 + $0x10] sm:$0xff]
        %v348 = vld [vmem:[%s277 + $0x18] sm:$0xff]
        %v349 = vld [vmem:[%s277 + $0x20] sm:$0xff]
        %v350 = vld [vmem:[%s277 + $0x28] sm:$0xff]
        %v351 = vld [vmem:[%s277 + $0x30] sm:$0xff]
        %v352 = vld [vmem:[%s277 + $0x38] sm:$0xff]
        %v353 = vld [vmem:[%s277 + $0x40] sm:$0xff]
        %v354 = vld [vmem:[%s277 + $0x48] sm:$0xff]
        %v355 = vld [vmem:[%s277 + $0x50] sm:$0xff]
        %v356 = vld [vmem:[%s277 + $0x58] sm:$0xff]
        %v357 = vld [vmem:[%s277 + $0x60] sm:$0xff]
        %v358 = vld [vmem:[%s277 + $0x68] sm:$0xff]
        %v359 = vld [vmem:[%s277 + $0x70] sm:$0xff]
        %v360 = vld [vmem:[%s277 + $0x78] sm:$0xff]
        %361 = vst [vmem:[%s327] sm:$0xff] %v345
        %362 = vst [vmem:[%s327 + $0x8] sm:$0xff] %v346
        %363 = vst [vmem:[%s327 + $0x10] sm:$0xff] %v347
        %364 = vst [vmem:[%s327 + $0x18] sm:$0xff] %v348
        %365 = vst [vmem:[%s327 + $0x20] sm:$0xff] %v349
        %366 = vst [vmem:[%s327 + $0x28] sm:$0xff] %v350
        %367 = vst [vmem:[%s327 + $0x30] sm:$0xff] %v351
        %368 = vst [vmem:[%s327 + $0x38] sm:$0xff] %v352
        %369 = vst [vmem:[%s327 + $0x40] sm:$0xff] %v353
        %370 = vst [vmem:[%s327 + $0x48] sm:$0xff] %v354
        %371 = vst [vmem:[%s327 + $0x50] sm:$0xff] %v355
        %372 = vst [vmem:[%s327 + $0x58] sm:$0xff] %v356
        %373 = vst [vmem:[%s327 + $0x60] sm:$0xff] %v357
        %374 = vst [vmem:[%s327 + $0x68] sm:$0xff] %v358
        %375 = vst [vmem:[%s327 + $0x70] sm:$0xff] %v359
        %376 = vst [vmem:[%s327 + $0x78] sm:$0xff] %v360
        %v377 = vld [vmem:[%s286] sm:$0xff]
        %v378 = vld [vmem:[%s286 + $0x8] sm:$0xff]
        %v379 = vld [vmem:[%s286 + $0x10] sm:$0xff]
        %v380 = vld [vmem:[%s286 + $0x18] sm:$0xff]
        %v381 = vld [vmem:[%s286 + $0x20] sm:$0xff]
        %v382 = vld [vmem:[%s286 + $0x28] sm:$0xff]
        %v383 = vld [vmem:[%s286 + $0x30] sm:$0xff]
        %v384 = vld [vmem:[%s286 + $0x38] sm:$0xff]
        %v385 = vld [vmem:[%s286 + $0x40] sm:$0xff]
        %v386 = vld [vmem:[%s286 + $0x48] sm:$0xff]
        %v387 = vld [vmem:[%s286 + $0x50] sm:$0xff]
        %v388 = vld [vmem:[%s286 + $0x58] sm:$0xff]
        %v389 = vld [vmem:[%s286 + $0x60] sm:$0xff]
        %v390 = vld [vmem:[%s286 + $0x68] sm:$0xff]
        %v391 = vld [vmem:[%s286 + $0x70] sm:$0xff]
        %v392 = vld [vmem:[%s286 + $0x78] sm:$0xff]
        %s393 = scalar_lea.vmem %s327, 128 [#allocation8]
        %394 = vst [vmem:[%s393] sm:$0xff] %v377
        %395 = vst [vmem:[%s393 + $0x8] sm:$0xff] %v378
        %396 = vst [vmem:[%s393 + $0x10] sm:$0xff] %v379
        %397 = vst [vmem:[%s393 + $0x18] sm:$0xff] %v380
        %398 = vst [vmem:[%s393 + $0x20] sm:$0xff] %v381
        %399 = vst [vmem:[%s393 + $0x28] sm:$0xff] %v382
        %400 = vst [vmem:[%s393 + $0x30] sm:$0xff] %v383
        %401 = vst [vmem:[%s393 + $0x38] sm:$0xff] %v384
        %402 = vst [vmem:[%s393 + $0x40] sm:$0xff] %v385
        %403 = vst [vmem:[%s393 + $0x48] sm:$0xff] %v386
        %404 = vst [vmem:[%s393 + $0x50] sm:$0xff] %v387
        %405 = vst [vmem:[%s393 + $0x58] sm:$0xff] %v388
        %406 = vst [vmem:[%s393 + $0x60] sm:$0xff] %v389
        %407 = vst [vmem:[%s393 + $0x68] sm:$0xff] %v390
        %408 = vst [vmem:[%s393 + $0x70] sm:$0xff] %v391
        %409 = vst [vmem:[%s393 + $0x78] sm:$0xff] %v392
        %v410 = vmin.f32 %v345, %v377
        %v411 = vmin.f32 %v346, %v378
        %v412 = vmin.f32 %v347, %v379
        %v413 = vmin.f32 %v348, %v380
        %v414 = vmin.f32 %v349, %v381
        %v415 = vmin.f32 %v350, %v382
        %v416 = vmin.f32 %v351, %v383
        %v417 = vmin.f32 %v352, %v384
        %v418 = vmin.f32 %v353, %v385
        %v419 = vmin.f32 %v354, %v386
        %v420 = vmin.f32 %v355, %v387
        %v421 = vmin.f32 %v356, %v388
        %v422 = vmin.f32 %v357, %v389
        %v423 = vmin.f32 %v358, %v390
        %v424 = vmin.f32 %v359, %v391
        %v425 = vmin.f32 %v360, %v392
        %v426 = vld [vmem:[%s295] sm:$0xff]
        %v427 = vld [vmem:[%s295 + $0x8] sm:$0xff]
        %v428 = vld [vmem:[%s295 + $0x10] sm:$0xff]
        %v429 = vld [vmem:[%s295 + $0x18] sm:$0xff]
        %v430 = vld [vmem:[%s295 + $0x20] sm:$0xff]
        %v431 = vld [vmem:[%s295 + $0x28] sm:$0xff]
        %v432 = vld [vmem:[%s295 + $0x30] sm:$0xff]
        %v433 = vld [vmem:[%s295 + $0x38] sm:$0xff]
        %v434 = vld [vmem:[%s295 + $0x40] sm:$0xff]
        %v435 = vld [vmem:[%s295 + $0x48] sm:$0xff]
        %v436 = vld [vmem:[%s295 + $0x50] sm:$0xff]
        %v437 = vld [vmem:[%s295 + $0x58] sm:$0xff]
        %v438 = vld [vmem:[%s295 + $0x60] sm:$0xff]
        %v439 = vld [vmem:[%s295 + $0x68] sm:$0xff]
        %v440 = vld [vmem:[%s295 + $0x70] sm:$0xff]
        %v441 = vld [vmem:[%s295 + $0x78] sm:$0xff]
        %s442 = scalar_lea.vmem %s327, 256 [#allocation8]
        %443 = vst [vmem:[%s442] sm:$0xff] %v426
        %444 = vst [vmem:[%s442 + $0x8] sm:$0xff] %v427
        %445 = vst [vmem:[%s442 + $0x10] sm:$0xff] %v428
        %446 = vst [vmem:[%s442 + $0x18] sm:$0xff] %v429
        %447 = vst [vmem:[%s442 + $0x20] sm:$0xff] %v430
        %448 = vst [vmem:[%s442 + $0x28] sm:$0xff] %v431
        %449 = vst [vmem:[%s442 + $0x30] sm:$0xff] %v432
        %450 = vst [vmem:[%s442 + $0x38] sm:$0xff] %v433
        %451 = vst [vmem:[%s442 + $0x40] sm:$0xff] %v434
        %452 = vst [vmem:[%s442 + $0x48] sm:$0xff] %v435
        %453 = vst [vmem:[%s442 + $0x50] sm:$0xff] %v436
        %454 = vst [vmem:[%s442 + $0x58] sm:$0xff] %v437
        %455 = vst [vmem:[%s442 + $0x60] sm:$0xff] %v438
        %456 = vst [vmem:[%s442 + $0x68] sm:$0xff] %v439
        %457 = vst [vmem:[%s442 + $0x70] sm:$0xff] %v440
        %458 = vst [vmem:[%s442 + $0x78] sm:$0xff] %v441
        %v459 = vmin.f32 %v410, %v426
        %v460 = vmin.f32 %v411, %v427
        %v461 = vmin.f32 %v412, %v428
        %v462 = vmin.f32 %v413, %v429
        %v463 = vmin.f32 %v414, %v430
        %v464 = vmin.f32 %v415, %v431
        %v465 = vmin.f32 %v416, %v432
        %v466 = vmin.f32 %v417, %v433
        %v467 = vmin.f32 %v418, %v434
        %v468 = vmin.f32 %v419, %v435
        %v469 = vmin.f32 %v420, %v436
        %v470 = vmin.f32 %v421, %v437
        %v471 = vmin.f32 %v422, %v438
        %v472 = vmin.f32 %v423, %v439
        %v473 = vmin.f32 %v424, %v440
        %v474 = vmin.f32 %v425, %v441
        %475 = vst [vmem:[%s334] sm:$0xff] %v459
        %476 = vst [vmem:[%s334 + $0x8] sm:$0xff] %v460
        %477 = vst [vmem:[%s334 + $0x10] sm:$0xff] %v461
        %478 = vst [vmem:[%s334 + $0x18] sm:$0xff] %v462
        %479 = vst [vmem:[%s334 + $0x20] sm:$0xff] %v463
        %480 = vst [vmem:[%s334 + $0x28] sm:$0xff] %v464
        %481 = vst [vmem:[%s334 + $0x30] sm:$0xff] %v465
        %482 = vst [vmem:[%s334 + $0x38] sm:$0xff] %v466
        %483 = vst [vmem:[%s334 + $0x40] sm:$0xff] %v467
        %484 = vst [vmem:[%s334 + $0x48] sm:$0xff] %v468
        %485 = vst [vmem:[%s334 + $0x50] sm:$0xff] %v469
        %486 = vst [vmem:[%s334 + $0x58] sm:$0xff] %v470
        %487 = vst [vmem:[%s334 + $0x60] sm:$0xff] %v471
        %488 = vst [vmem:[%s334 + $0x68] sm:$0xff] %v472
        %489 = vst [vmem:[%s334 + $0x70] sm:$0xff] %v473
        %490 = vst [vmem:[%s334 + $0x78] sm:$0xff] %v474
        %s491 = sand.u32 %s134, 1
        %s492 = scalar_lea.sflag [#allocation4], %s491
        %s493 = sand.u32 %s134, 1
        %s494 = smul.addr %s493, 384
        %s495 = scalar_lea.vmem [#allocation8], %s494
        %s496 = sand.u32 %s162, 1
        %s497 = scalar_lea.sflag [#allocation10], %s496
        %s498 = sand.u32 %s162, 1
        %s499 = smul.addr %s498, 128
        %s500 = scalar_lea.vmem [#allocation9], %s499
        // Predicated region
        $region45: #{tpu_custom_call.1} parent=31 // pred_check
          %p501 = pneg %p144
        $region46: #{tpu_custom_call.1} parent=31 // pred_check_branch
          %503 = sbr.rel (%p501) target = $region48
        $region47: #{tpu_custom_call.1} parent=31 // pred_region
          %s504 = smul.u32 8, %s32
          %s505 = smul.u32 2, %s33
          %s507 = ssub.s32 6144, 6144
          %508 = vsyncadd %s492, %s507
          %s509 = smul.addr %s504, 4
          %s510 = sadd.s32 %s505, %s509
          %s511 = smul.addr %s510, 128
          %s512 = scalar_lea.hbm %s3, %s511
          %s513 = sshll.u32 %s495, 4
          %s514 = int_to_ptr.vmem [resolvable:$true] %s513
          %519 = dma.vmem_to_hbm [thread:$0]  %s514, 6144, %s512, %s492, 256, 512, 16
        $region48: #{tpu_custom_call.1} parent=31 // pred_fallthru
          _
        // Predicated region
        $region49: #{tpu_custom_call.1} parent=31 // pred_check
          %p520 = pneg %p172
        $region50: #{tpu_custom_call.1} parent=31 // pred_check_branch
          %522 = sbr.rel (%p520) target = $region52
        $region51: #{tpu_custom_call.1} parent=31 // pred_region
          %s523 = smul.u32 8, %s32
          %s524 = smul.u32 2, %s33
          %s526 = ssub.s32 2048, 2048
          %527 = vsyncadd %s497, %s526
          %s528 = smul.addr %s523, 4
          %s529 = sadd.s32 %s524, %s528
          %s530 = smul.addr %s529, 128
          %s531 = scalar_lea.hbm %s4, %s530
          %s532 = sshll.u32 %s500, 4
          %s533 = int_to_ptr.vmem [resolvable:$true] %s532
          %538 = dma.vmem_to_hbm [thread:$0]  %s533, 2048, %s531, %s497, 256, 512, 16
        $region52: #{tpu_custom_call.1} parent=31 // pred_fallthru
          _
      $region32: #{tpu_custom_call.1} parent=5 // pred_fallthru
        _
      %p539 = scmp.le.s32.totalorder 2, %s23
      // Predicated region
      $region53: #{tpu_custom_call.1} parent=5 // pred_check
        %p540 = pneg %p539
      $region54: #{tpu_custom_call.1} parent=5 // pred_check_branch
        %542 = sbr.rel (%p540) target = $region56
      $region55: #{tpu_custom_call.1} parent=5 // pred_region
        %s543 = ssub.s32 %s23, 2
        // Predicated region
        $region57: #{tpu_custom_call.1} parent=55 // pred_check
          %p544 = pneg %p150
        $region58: #{tpu_custom_call.1} parent=55 // pred_check_branch
          %546 = sbr.rel (%p544) target = $region60
        $region59: #{tpu_custom_call.1} parent=55 // pred_region
          %s547 = sand.u32 %s135, 1
          %s548 = scalar_lea.sflag [#allocation4], %s547
          %s549 = sand.u32 %s135, 1
          %s550 = smul.addr %s549, 384
          %s551 = scalar_lea.vmem [#allocation8], %s550
          %552 = dma.done %s548, 6144
        $region60: #{tpu_custom_call.1} parent=55 // pred_fallthru
          _
        // Predicated region
        $region61: #{tpu_custom_call.1} parent=55 // pred_check
          %p553 = pneg %p178
        $region62: #{tpu_custom_call.1} parent=55 // pred_check_branch
          %555 = sbr.rel (%p553) target = $region64
        $region63: #{tpu_custom_call.1} parent=55 // pred_region
          %s556 = sand.u32 %s163, 1
          %s557 = scalar_lea.sflag [#allocation10], %s556
          %s558 = sand.u32 %s163, 1
          %s559 = smul.addr %s558, 128
          %s560 = scalar_lea.vmem [#allocation9], %s559
          %561 = dma.done %s557, 2048
        $region64: #{tpu_custom_call.1} parent=55 // pred_fallthru
          _
      $region56: #{tpu_custom_call.1} parent=5 // pred_fallthru
        _
    $region6: #{tpu_custom_call.1} parent=1 // loop_footer
      %s27 = sadd.s32 1, %s23
    $region7: #{tpu_custom_call.1} parent=1 // loop_footer_branch
      %22 = sbr.rel target = $region3
    $region8: #{tpu_custom_call.1} parent=1 // loop_exit
      _
    %562 = vsyncpa [#allocation3], 1
    %s563 = scalar_lea.sflag [#allocation3], 1
    %564 = vsyncpa %s563, 1
    %565 = vsyncpa [#allocation6], 1
    %s566 = scalar_lea.sflag [#allocation6], 1
    %567 = vsyncpa %s566, 1
    %568 = vsyncpa [#allocation4], 1
    %s569 = scalar_lea.sflag [#allocation4], 1
    %570 = vsyncpa %s569, 1
    %571 = vsyncpa [#allocation10], 1
    %s572 = scalar_lea.sflag [#allocation10], 1
    %573 = vsyncpa %s572, 1

</llo_original>
